<compile_context>
chip_gen: v6e
topology: v6e:2x2x1
jax: 0.10.0
libtpu: 0.0.40
codegen_flags: <defaults>
</compile_context>

<pallas_src>
import functools
import math

import numpy as np

import jax
import jax.numpy as jnp
from jax.experimental import pallas as pl
from jax.experimental.pallas import tpu as pltpu


def _rfft_kernel(x_ref, basis_ref, out_ref):
    # x_ref:     (TM, N)    real input rows
    # basis_ref: (N,  TKN)  [cos | pad | -sin | pad] column tile (lane-dense)
    # out_ref:   (TM, TKN)  [Re  | pad |  Im  | pad] single unmasked lane-dense store
    out_ref[...] = jnp.dot(
        x_ref[...], basis_ref[...], preferred_element_type=jnp.float32
    )


def _round_up(v: int, mult: int) -> int:
    return ((v + mult - 1) // mult) * mult


@functools.lru_cache(maxsize=16)
def _make_dft_basis_np(n: int, kc: int) -> np.ndarray:
    """Host-side (cached) rfft basis with lane-aligned Re/Im blocks.

    X[k] = sum_n x[n] * exp(-2i*pi*n*k/N)  =>  Re = x @ cos,  Im = x @ (-sin).
    Columns: [cos (K cols) | 0-pad to kc | -sin (K cols) | 0-pad to 2*kc].
    Phase is reduced mod N in exact int64 arithmetic and evaluated in float64,
    so the f32 basis stays accurate for large N.
    """
    k = n // 2 + 1
    phase = (np.arange(n, dtype=np.int64)[:, None]
             * np.arange(k, dtype=np.int64)[None, :]) % n          # exact, no overflow
    ang = (2.0 * np.pi / n) * phase.astype(np.float64)             # (N, K)
    basis = np.zeros((n, 2 * kc), dtype=np.float32)
    basis[:, :k] = np.cos(ang)
    basis[:, kc:kc + k] = -np.sin(ang)                             # negation pre-folded
    # TODO(synk): for very large N (dense O(N*K) DFT no longer sensible) use a
    # Cooley-Tukey split instead of this dense-basis path.
    return basis


def _vmem_plan():
    """Generation-aware VMEM limit / planning budget / row-tile cap."""
    try:
        cap = int(pltpu.get_tpu_info().vmem_capacity_bytes)
    except Exception:
        cap = 64 << 20                      # conservative fallback (v7x per-TC)
    limit = min((cap * 3) // 4, 100 << 20)  # scoped VMEM we request
    budget = max(limit - (8 << 20), 16 << 20)
    tm_cap = 1024 if cap >= (96 << 20) else 512
    return limit, budget, tm_cap


def _plan_tiles(m: int, n: int, kp: int, budget: int, tm_cap: int):
    """Pick (row tile, column tile, basis buffer count)."""
    # Column tile over Kp so the basis tile fits comfortably in VMEM.
    max_basis = budget // 3
    if n * kp * 4 <= max_basis:
        tkn = kp
        basis_bufs = 1                      # constant index_map -> single buffer
    else:
        tkn = max(128, ((max_basis // (n * 4)) // 128) * 128)
        tkn = min(tkn, kp)
        while kp % tkn != 0:                # 128 always divides kp, so this terminates
            tkn -= 128
        basis_bufs = 2                      # basis block changes along the column axis
        # TODO(synk): for extreme N also tile the contraction axis (N) with an
        # "arbitrary" grid dim and a VMEM f32 accumulator.

    # Row tile: largest multiple of 8 keeping double-buffered x/out tiles +
    # basis tile(s) inside the budget.
    fixed = n * tkn * 4 * basis_bufs
    per_row = (2 * n + 2 * tkn) * 4         # double-buffered input + output rows
    tm = max(8, ((budget - fixed) // per_row // 8) * 8)
    tm = min(tm, tm_cap, _round_up(m, 8))
    # Guarantee >=2 row tiles when possible so "parallel" actually feeds both
    # TensorCores on v7x megacore.
    if m >= 16:
        tm = min(tm, _round_up((m + 1) // 2, 8))
    return tm, tkn, basis_bufs


def fourier_decomp_forward(x: jnp.ndarray, use_bf16_inputs: bool = False) -> jnp.ndarray:
    """Pallas implementation of torch.fft.rfft(x, dim=-1).

    x: (..., N) float32.  Returns complex64 of shape (..., N//2 + 1).
    """
    assert x.dtype == jnp.float32
    *lead, n = x.shape
    m = math.prod(lead) if lead else 1
    k = n // 2 + 1
    kc = _round_up(k, 128)                  # lane-aligned start of the Im block
    kp = 2 * kc                             # lane-dense output width

    limit, budget, tm_cap = _vmem_plan()
    tm, tkn, basis_bufs = _plan_tiles(m, n, kp, budget, tm_cap)

    x2d = x.reshape(m, n)                   # no padding: partial last tile is masked
    basis = jnp.asarray(_make_dft_basis_np(n, kc))

    if use_bf16_inputs:
        # Optional MXU-bound fast path: bf16 operands, f32 accumulation.
        x2d = x2d.astype(jnp.bfloat16)
        basis = basis.astype(jnp.bfloat16)

    grid = (pl.cdiv(m, tm), kp // tkn)

    out = pl.pallas_call(
        _rfft_kernel,
        out_shape=jax.ShapeDtypeStruct((m, kp), jnp.float32),
        grid_spec=pltpu.PrefetchScalarGridSpec(
            num_scalar_prefetch=0,
            grid=grid,
            in_specs=[
                # row tiles stream through VMEM (double-buffered by Pallas)
                pl.BlockSpec((tm, n), lambda i, j: (i, 0)),
                # basis: resident single buffer when it fits, else column-tiled
                pl.BlockSpec((n, tkn), lambda i, j: (0, j),
                             pipeline_mode=pl.Buffered(basis_bufs)),
            ],
            out_specs=pl.BlockSpec((tm, tkn), lambda i, j: (i, j)),
        ),
        compiler_params=pltpu.CompilerParams(
            # row tiles and column tiles are independent -> megacore sharding
            dimension_semantics=("parallel", "parallel"),
            vmem_limit_bytes=limit,
        ),
    )(x2d, basis)

    re = out[:, :k]                         # both slices start lane-aligned
    im = out[:, kc:kc + k]
    x_ft = jax.lax.complex(re, im).reshape(*lead, k)
    return x_ft


if __name__ == "__main__":
    # FourierDecomp has no parameters (empty __init__), so nothing to init.
    key = jax.random.PRNGKey(0)
    B, L, N = 2, 8, 32                      # rfft over N=32 -> 17 freqs
    x = jax.random.normal(key, (B, L, N), dtype=jnp.float32)

    x_ft = fourier_decomp_forward(x)
    x_ft = jax.block_until_ready(x_ft)

    # sanity check against jnp reference rfft
    ref = jnp.fft.rfft(x, axis=-1)
    assert x_ft.shape == ref.shape, (x_ft.shape, ref.shape)
    assert jnp.allclose(x_ft, ref, atol=1e-3, rtol=1e-3)

    print("KERNEL_OK")
</pallas_src>

<mosaic_0001>
module attributes {stable_mosaic.version = 11 : i64} {
  func.func @_rfft_kernel(%arg0: i32, %arg1: i32, %arg2: memref<8x32xf32, #tpu.memory_space<vmem>>, %arg3: memref<32x256xf32, #tpu.memory_space<vmem>>, %arg4: memref<8x256xf32, #tpu.memory_space<vmem>>) attributes {dimension_semantics = [#tpu.dimension_semantics<parallel>, #tpu.dimension_semantics<parallel>], iteration_bounds = array<i64: 2, 1>, scalar_prefetch = 0 : i64, scratch_operands = 0 : i64, tpu.core_type = #tpu.core_type<tc>, window_params = [{transform_indices = @transform_0, window_bounds = array<i64: 8, 32>}, {pipeline_mode = #tpu.pipeline_mode<synchronous>, transform_indices = @transform_1, window_bounds = array<i64: 32, 256>}, {transform_indices = @transform_2, window_bounds = array<i64: 8, 256>}]} {
    %c0 = arith.constant 0 : index
    %c0_0 = arith.constant 0 : index
    %0 = vector.load %arg2[%c0, %c0_0] : memref<8x32xf32, #tpu.memory_space<vmem>>, vector<8x32xf32>
    %c0_1 = arith.constant 0 : index
    %c0_2 = arith.constant 0 : index
    %1 = vector.load %arg3[%c0_1, %c0_2] : memref<32x256xf32, #tpu.memory_space<vmem>>, vector<32x256xf32>
    %cst = arith.constant dense<0.000000e+00> : vector<8x256xf32>
    %2 = tpu.matmul %0, %1, %cst {dimension_numbers = #tpu.dot_dimension_numbers<[1], [0], [0], [1], [0, 0, 1, 1], [], []>} : vector<8x32xf32>, vector<32x256xf32>, vector<8x256xf32> -> vector<8x256xf32>
    %c0_3 = arith.constant 0 : index
    %c0_4 = arith.constant 0 : index
    %3 = vector.load %arg4[%c0_3, %c0_4] : memref<8x256xf32, #tpu.memory_space<vmem>>, vector<8x256xf32>
    tpu.vector_store %arg4[%c0_3, %c0_4], %2 {strides = array<i32>} : memref<8x256xf32, #tpu.memory_space<vmem>>, vector<8x256xf32>,
    return
  }
  func.func @transform_0(%arg0: i32, %arg1: i32) -> (i32, i32) {
    %c0_i32 = arith.constant 0 : i32
    %c0_i32_0 = arith.constant 0 : i32
    return %arg0, %c0_i32 : i32, i32
  }
  func.func @transform_1(%arg0: i32, %arg1: i32) -> (i32, i32) {
    %c0_i32 = arith.constant 0 : i32
    %c0_i32_0 = arith.constant 0 : i32
    return %c0_i32, %arg1 : i32, i32
  }
  func.func @transform_2(%arg0: i32, %arg1: i32) -> (i32, i32) {
    %c0_i32 = arith.constant 0 : i32
    return %arg0, %arg1 : i32, i32
  }
}

</mosaic_0001>

<llo_original>
// kernel: tpu_custom_call.1
$region0: #{tpu_custom_call.1}
  #allocation0 [shape = 'u32[]', space=smem, size = 0x4, offset = 0x4, fixed_abs, tag = 'smem constant byte address 0x4 - core index']
  #allocation1 [shape = 'u32[144,128]{1,0:T(1,128)}', space=vmem, size = 0x12000, scoped, tag = 'internal scratch']
  %s0 = inlined_call_operand.hbm [shape: f32[16,32], index: 0, kind: input, shape index: {}]
  %s1 = inlined_call_operand.hbm [shape: f32[32,256], index: 1, kind: input, shape index: {}]
  %s2 = inlined_call_operand.hbm [shape: f32[16,256], index: 2, kind: output, shape index: {}]
  %s3 = sld [smem:[#allocation0]]
  $region49: #{tpu_custom_call.1} parent=0
    _
  %s5 = ssub.s32 1, %s3
  %s6 = scalar_select 0, %s5, %s3
  $region1: #{tpu_custom_call.1} parent=0
    #allocation2 [shape = 'u8[8192]{0}', space=vmem, size = 0x2000, scoped, tag = 'input window, operand 0']
    #allocation3 [shape = 's32[2]{0}', space=sflag, size = 0x8, scoped, tag = 'scoped memory for tpu_custom_call.1']
    #allocation4 [shape = 's32[2]{0}', space=sflag, size = 0x8, scoped, tag = 'scoped memory for tpu_custom_call.1']
    #allocation5 [shape = 'u8[32768]{0}', space=vmem, size = 0x8000, scoped, tag = 'input window, operand 1, single buffered']
    #allocation6 [shape = 's32[1]{0}', space=sflag, size = 0x4, scoped, tag = 'scoped memory for tpu_custom_call.1']
    #allocation7 [shape = 'u8[16384]{0}', space=vmem, size = 0x4000, scoped, tag = 'output window, operand 0']
    %7 = vsyncpa [#allocation3], 0
    %s8 = scalar_lea.sflag [#allocation3], 1
    %9 = vsyncpa %s8, 0
    %10 = vsyncpa [#allocation6], 0
    %11 = vsyncpa [#allocation4], 0
    %s12 = scalar_lea.sflag [#allocation4], 1
    %13 = vsyncpa %s12, 0
    loop: start=0, step=1, limit=4
    $region2: #{tpu_custom_call.1} parent=1 // loop_pre_header
      _
    $region3: #{tpu_custom_call.1} parent=1 // loop_header
      %s15 = sphi 0, %s19
      %p16 = scmp.ge.s32.totalorder %s15, 4
      %s22 = sphi 0, %s34
      %s23 = sphi 0, %s30
      %s24 = sphi 0, %s22
      %s25 = sphi 0, %s23
      %s26 = sphi 0, %s24
      %s27 = sphi 0, %s25
      %s37 = sphi 0, %s39
      %s40 = sphi 0, %s37
      %s41 = sphi 0, %s40
      %s57 = sphi 0, %s41
      %s63 = sphi 0, %s65
      %s66 = sphi 0, %s63
      %s67 = sphi 0, %s66
      %s83 = sphi 0, %s67
      %s91 = sphi 0, %s93
      %s94 = sphi 0, %s91
      %s95 = sphi 0, %s94
      %s111 = sphi 0, %s95
    $region4: #{tpu_custom_call.1} parent=1 // loop_header_branch
      %18 = sbr.rel (%p16) target = $region8
    $region5: #{tpu_custom_call.1} parent=1 // loop_body
      %s20 = ssub.s32 %s15, 1
      %s21 = ssub.s32 %s15, 2
      %s28 = sadd.s32 1, %s23
      %p29 = scmp.ge.s32.totalorder %s28, 1
      %s30 = scalar_select %p29, 0, %s28
      %s31 = sadd.s32 1, %s22
      %s32 = scalar_select %p29, %s31, %s22
      %p33 = scmp.ge.s32.totalorder %s32, 2
      %s34 = scalar_select %p33, 0, %s32
      %s35 = ssub.s32 %s22, %s34
      %p36 = scmp.eq.s32.totalorder %s35, 0
      %s38 = sadd.s32 %s37, 1
      %s39 = scalar_select %p36, %s37, %s38
      %p42 = pneg %p36
      %p43 = scmp.eq.s32.totalorder %s15, 1
      %p44 = por %p42, %p43
      %p45 = scmp.ne.s32.totalorder %s37, %s40
      %p46 = scmp.eq.s32.totalorder %s15, 0
      %p47 = por %p45, %p46
      %p48 = scmp.ne.s32.totalorder %s37, %s40
      %p49 = scmp.eq.s32.totalorder %s20, 1
      %p50 = por %p48, %p49
      %p51 = scmp.ne.s32.totalorder %s40, %s41
      %p52 = scmp.eq.s32.totalorder %s20, 0
      %p53 = por %p51, %p52
      %p54 = scmp.ne.s32.totalorder %s40, %s41
      %p55 = scmp.eq.s32.totalorder %s21, 1
      %p56 = por %p54, %p55
      %p58 = scmp.ne.s32.totalorder %s41, %s57
      %p59 = scmp.eq.s32.totalorder %s21, 0
      %p60 = por %p58, %p59
      %s61 = ssub.s32 %s23, %s30
      %p62 = scmp.eq.s32.totalorder %s61, 0
      %s64 = sadd.s32 %s63, 1
      %s65 = scalar_select %p62, %s63, %s64
      %p68 = pneg %p62
      %p69 = scmp.eq.s32.totalorder %s15, 1
      %p70 = por %p68, %p69
      %p71 = scmp.ne.s32.totalorder %s63, %s66
      %p72 = scmp.eq.s32.totalorder %s15, 0
      %p73 = por %p71, %p72
      %p74 = scmp.ne.s32.totalorder %s63, %s66
      %p75 = scmp.eq.s32.totalorder %s20, 1
      %p76 = por %p74, %p75
      %p77 = scmp.ne.s32.totalorder %s66, %s67
      %p78 = scmp.eq.s32.totalorder %s20, 0
      %p79 = por %p77, %p78
      %p80 = scmp.ne.s32.totalorder %s66, %s67
      %p81 = scmp.eq.s32.totalorder %s21, 1
      %p82 = por %p80, %p81
      %p84 = scmp.ne.s32.totalorder %s67, %s83
      %p85 = scmp.eq.s32.totalorder %s21, 0
      %p86 = por %p84, %p85
      %s87 = ssub.s32 %s22, %s34
      %s88 = ssub.s32 %s23, %s30
      %s89 = sor.u32 %s87, %s88
      %p90 = scmp.eq.s32.totalorder %s89, 0
      %s92 = sadd.s32 %s91, 1
      %s93 = scalar_select %p90, %s91, %s92
      %p96 = pneg %p90
      %p97 = scmp.eq.s32.totalorder %s15, 1
      %p98 = por %p96, %p97
      %p99 = scmp.ne.s32.totalorder %s91, %s94
      %p100 = scmp.eq.s32.totalorder %s15, 0
      %p101 = por %p99, %p100
      %p102 = scmp.ne.s32.totalorder %s91, %s94
      %p103 = scmp.eq.s32.totalorder %s20, 1
      %p104 = por %p102, %p103
      %p105 = scmp.ne.s32.totalorder %s94, %s95
      %p106 = scmp.eq.s32.totalorder %s20, 0
      %p107 = por %p105, %p106
      %p108 = scmp.ne.s32.totalorder %s94, %s95
      %p109 = scmp.eq.s32.totalorder %s21, 1
      %p110 = por %p108, %p109
      %p112 = scmp.ne.s32.totalorder %s95, %s111
      %p113 = scmp.eq.s32.totalorder %s21, 0
      %p114 = por %p112, %p113
      %p115 = scmp.le.s32.totalorder 1, %s15
      %p116 = scmp.lt.s32.totalorder %s15, 3
      %p117 = pnand %p115, %p116
      %p118 = pneg %p117
      // Predicated region
      $region9: #{tpu_custom_call.1} parent=5 // pred_check
        _
      $region10: #{tpu_custom_call.1} parent=5 // pred_check_branch
        %120 = sbr.rel (%p117) target = $region12
      $region11: #{tpu_custom_call.1} parent=5 // pred_region
        %s121 = ssub.s32 %s15, 1
        // Predicated region
        $region13: #{tpu_custom_call.1} parent=11 // pred_check
          %p122 = pneg %p79
        $region14: #{tpu_custom_call.1} parent=11 // pred_check_branch
          %124 = sbr.rel (%p122) target = $region16
        $region15: #{tpu_custom_call.1} parent=11 // pred_region
          %s125 = smul.u32 2, %s25
          %s127 = ssub.s32 1024, 1024
          %128 = vsyncadd [#allocation6], %s127
          %s129 = smul.addr %s125, 128
          %s130 = scalar_lea.hbm %s1, %s129
          %s131 = sshll.u32 [#allocation5], 4
          %s132 = int_to_ptr.vmem [resolvable:$true] %s131
          %137 = dma.hbm_to_vmem [thread:$0]  %s130, 1024, %s132, [#allocation6], 256, 256, 16
        $region16: #{tpu_custom_call.1} parent=11 // pred_fallthru
          _
      $region12: #{tpu_custom_call.1} parent=5 // pred_fallthru
        _
      %p138 = scmp.lt.s32.totalorder %s15, 2
      // Predicated region
      $region17: #{tpu_custom_call.1} parent=5 // pred_check
        %p139 = pneg %p138
      $region18: #{tpu_custom_call.1} parent=5 // pred_check_branch
        %141 = sbr.rel (%p139) target = $region20
      $region19: #{tpu_custom_call.1} parent=5 // pred_region
        // Predicated region
        $region21: #{tpu_custom_call.1} parent=19 // pred_check
          %p142 = pneg %p47
        $region22: #{tpu_custom_call.1} parent=19 // pred_check_branch
          %144 = sbr.rel (%p142) target = $region24
        $region23: #{tpu_custom_call.1} parent=19 // pred_region
          %s145 = sand.u32 %s37, 1
          %s146 = scalar_lea.sflag [#allocation3], %s145
          %s147 = sand.u32 %s37, 1
          %s148 = smul.addr %s147, 8
          %s149 = scalar_lea.vmem [#allocation2], %s148
          %s151 = ssub.s32 128, 128
          %152 = vsyncadd %s146, %s151
          %s153 = smul.addr %s22, 128
          %s154 = scalar_lea.hbm %s0, %s153
          %s156 = sshll.u32 %s149, 4
          %s157 = int_to_ptr.vmem [resolvable:$true] %s156
          %159 = dma.hbm_to_vmem [thread:$0]  %s154, 128, %s157, %s146
        $region24: #{tpu_custom_call.1} parent=19 // pred_fallthru
          _
      $region20: #{tpu_custom_call.1} parent=5 // pred_fallthru
        _
      %p160 = scmp.le.s32.totalorder 1, %s15
      %p161 = scmp.lt.s32.totalorder %s15, 3
      %p162 = pnand %p160, %p161
      %p163 = pneg %p162
      // Predicated region
      $region25: #{tpu_custom_call.1} parent=5 // pred_check
        _
      $region26: #{tpu_custom_call.1} parent=5 // pred_check_branch
        %165 = sbr.rel (%p162) target = $region28
      $region27: #{tpu_custom_call.1} parent=5 // pred_region
        %s166 = ssub.s32 %s15, 1
        %s167 = sand.u32 %s40, 1
        %s168 = scalar_lea.sflag [#allocation3], %s167
        %s169 = sand.u32 %s40, 1
        %s170 = smul.addr %s169, 8
        %s171 = scalar_lea.vmem [#allocation2], %s170
        // Predicated region
        $region29: #{tpu_custom_call.1} parent=27 // pred_check
          %p172 = pneg %p53
        $region30: #{tpu_custom_call.1} parent=27 // pred_check_branch
          %174 = sbr.rel (%p172) target = $region32
        $region31: #{tpu_custom_call.1} parent=27 // pred_region
          %175 = dma.done %s168, 128
        $region32: #{tpu_custom_call.1} parent=27 // pred_fallthru
          _
        // Predicated region
        $region33: #{tpu_custom_call.1} parent=27 // pred_check
          %p176 = pneg %p79
        $region34: #{tpu_custom_call.1} parent=27 // pred_check_branch
          %178 = sbr.rel (%p176) target = $region36
        $region35: #{tpu_custom_call.1} parent=27 // pred_region
          %179 = dma.done [#allocation6], 1024
        $region36: #{tpu_custom_call.1} parent=27 // pred_fallthru
          _
        %s180 = sand.u32 %s40, 1
        %s181 = scalar_lea.sflag [#allocation3], %s180
        %s182 = sand.u32 %s40, 1
        %s183 = smul.addr %s182, 8
        %s184 = scalar_lea.vmem [#allocation2], %s183
        %p185 = pneg %p53
        %p186 = pneg %p50
        %p187 = pneg %p79
        %p188 = pneg %p76
        %p189 = pneg %p107
        %p190 = pneg %p104
        %s191 = sand.u32 %s94, 1
        %s192 = scalar_lea.sflag [#allocation4], %s191
        %s193 = sand.u32 %s94, 1
        %s194 = smul.addr %s193, 16
        %s195 = scalar_lea.vmem [#allocation7], %s194
        %s196 = smul.u32 2, %s25
        %s197 = smul.u32 2, %s25
        %v198 = vld [vmem:[%s171] sm:$0xff]
        %v199 = vld [vmem:[#allocation5] sm:$0xff]
        %v200 = vld [vmem:[#allocation5 + $0x8] sm:$0xff]
        %v201 = vld [vmem:[#allocation5 + $0x10] sm:$0xff]
        %v202 = vld [vmem:[#allocation5 + $0x18] sm:$0xff]
        %v203 = vld [vmem:[#allocation5 + $0x20] sm:$0xff]
        %v204 = vld [vmem:[#allocation5 + $0x28] sm:$0xff]
        %v205 = vld [vmem:[#allocation5 + $0x30] sm:$0xff]
        %v206 = vld [vmem:[#allocation5 + $0x38] sm:$0xff]
        %vm207 = vcmask 261120
        %v209 = vsel %vm207, %v198, 0
        %211 = vmatprep.subr.mxu0 0.0
        %212 = vmatpush1.msra.mxu0 0.0
        %213 = vmatprep.subr.mxu0 0.0
        %214 = vmatpush1.msra.mxu0 0.0
        %215 = vmatprep.subr.mxu0 0.0
        %216 = vmatpush1.msra.mxu0 0.0
        %217 = vmatprep.subr.mxu0 0.0
        %218 = vmatpush1.msra.mxu0 0.0
        %219 = vmatprep.subr.mxu0 0.0
        %220 = vmatpush1.msra.mxu0 0.0
        %221 = vmatprep.subr.mxu0 0.0
        %222 = vmatpush1.msra.mxu0 0.0
        %223 = vmatprep.subr.mxu0 0.0
        %224 = vmatpush1.msra.mxu0 0.0
        %225 = vmatprep.subr.mxu0 0.0
        %226 = vmatpush1.msra.mxu0 0.0
        %227 = vmatprep.subr.mxu0 0.0
        %228 = vmatpush1.msra.mxu0 0.0
        %229 = vmatprep.subr.mxu0 0.0
        %230 = vmatpush1.msra.mxu0 0.0
        %231 = vmatprep.subr.mxu0 0.0
        %232 = vmatpush1.msra.mxu0 0.0
        %233 = vmatprep.subr.mxu0 0.0
        %234 = vmatpush1.msra.mxu0 0.0
        %235 = vmatprep.subr.mxu0 %v206
        %236 = vmatpush1.msra.mxu0 %v205
        %237 = vmatprep.subr.mxu0 %v204
        %238 = vmatpush1.msra.mxu0 %v203
        %239 = vmatprep.subr.mxu0 %v202
        %240 = vmatpush1.msra.mxu0 %v201
        %241 = vmatprep.subr.mxu0 %v200
        %242 = vmatpush1.msra.mxu0 %v199
        %243 = vmatprep.subr.mxu0 0.0
        %244 = vmatpush2.msra.mxu0 0.0
        %245 = vmatprep.subr.mxu0 0.0
        %246 = vmatpush2.msra.mxu0 0.0
        %247 = vmatprep.subr.mxu0 0.0
        %248 = vmatpush2.msra.mxu0 0.0
        %249 = vmatprep.subr.mxu0 0.0
        %250 = vmatpush2.msra.mxu0 0.0
        %251 = vmatprep.subr.mxu0 0.0
        %252 = vmatpush2.msra.mxu0 0.0
        %253 = vmatprep.subr.mxu0 0.0
        %254 = vmatpush2.msra.mxu0 0.0
        %255 = vmatprep.subr.mxu0 0.0
        %256 = vmatpush2.msra.mxu0 0.0
        %257 = vmatprep.subr.mxu0 0.0
        %258 = vmatpush2.msra.mxu0 0.0
        %259 = vmatprep.subr.mxu0 0.0
        %260 = vmatpush2.msra.mxu0 0.0
        %261 = vmatprep.subr.mxu0 0.0
        %262 = vmatpush2.msra.mxu0 0.0
        %263 = vmatprep.subr.mxu0 0.0
        %264 = vmatpush2.msra.mxu0 0.0
        %265 = vmatprep.subr.mxu0 0.0
        %266 = vmatpush2.msra.mxu0 0.0
        %267 = vmatprep.subr.mxu0 0.0
        %268 = vmatpush2.msra.mxu0 0.0
        %269 = vmatprep.subr.mxu0 0.0
        %270 = vmatpush2.msra.mxu0 0.0
        %271 = vmatprep.subr.mxu0 0.0
        %272 = vmatpush2.msra.mxu0 0.0
        %273 = vmatprep.subr.mxu0 0.0
        %274 = vmatpush2.msra.mxu0 0.0
        %275 = vmatprep.mubr.f32.mxu0 0.0
        %276 = vmatmul.mubr.f32.gmra.mxu0 %v209
        %v277 = vpop.f32.mrf.mxu0
        %v278 = vadd.f32 0.0, %v277
        %v279 = vpop.f32.mrf.mxu0
        %v280 = vadd.f32 0.0, %v279
        %281 = vdwg.mxu0
        %282 = vst [vmem:[%s195] sm:$0xff] %v278
        %283 = vst [vmem:[%s195 + $0x8] sm:$0xff] %v280
        %s284 = sand.u32 %s94, 1
        %s285 = scalar_lea.sflag [#allocation4], %s284
        %s286 = sand.u32 %s94, 1
        %s287 = smul.addr %s286, 16
        %s288 = scalar_lea.vmem [#allocation7], %s287
        // Predicated region
        $region37: #{tpu_custom_call.1} parent=27 // pred_check
          %p289 = pneg %p104
        $region38: #{tpu_custom_call.1} parent=27 // pred_check_branch
          %291 = sbr.rel (%p289) target = $region40
        $region39: #{tpu_custom_call.1} parent=27 // pred_region
          %s292 = smul.u32 2, %s25
          %s294 = ssub.s32 256, 256
          %295 = vsyncadd %s285, %s294
          %s296 = smul.addr %s24, 2
          %s297 = sadd.s32 %s292, %s296
          %s298 = smul.addr %s297, 128
          %s299 = scalar_lea.hbm %s2, %s298
          %s301 = sshll.u32 %s288, 4
          %s302 = int_to_ptr.vmem [resolvable:$true] %s301
          %304 = dma.vmem_to_hbm [thread:$0]  %s302, 256, %s299, %s285
        $region40: #{tpu_custom_call.1} parent=27 // pred_fallthru
          _
      $region28: #{tpu_custom_call.1} parent=5 // pred_fallthru
        _
      %p305 = scmp.le.s32.totalorder 2, %s15
      // Predicated region
      $region41: #{tpu_custom_call.1} parent=5 // pred_check
        %p306 = pneg %p305
      $region42: #{tpu_custom_call.1} parent=5 // pred_check_branch
        %308 = sbr.rel (%p306) target = $region44
      $region43: #{tpu_custom_call.1} parent=5 // pred_region
        %s309 = ssub.s32 %s15, 2
        // Predicated region
        $region45: #{tpu_custom_call.1} parent=43 // pred_check
          %p310 = pneg %p110
        $region46: #{tpu_custom_call.1} parent=43 // pred_check_branch
          %312 = sbr.rel (%p310) target = $region48
        $region47: #{tpu_custom_call.1} parent=43 // pred_region
          %s313 = sand.u32 %s95, 1
          %s314 = scalar_lea.sflag [#allocation4], %s313
          %s315 = sand.u32 %s95, 1
          %s316 = smul.addr %s315, 16
          %s317 = scalar_lea.vmem [#allocation7], %s316
          %318 = dma.done %s314, 256
        $region48: #{tpu_custom_call.1} parent=43 // pred_fallthru
          _
      $region44: #{tpu_custom_call.1} parent=5 // pred_fallthru
        _
    $region6: #{tpu_custom_call.1} parent=1 // loop_footer
      %s19 = sadd.s32 1, %s15
    $region7: #{tpu_custom_call.1} parent=1 // loop_footer_branch
      %14 = sbr.rel target = $region3
    $region8: #{tpu_custom_call.1} parent=1 // loop_exit
      _
    %319 = vsyncpa [#allocation3], 1
    %s320 = scalar_lea.sflag [#allocation3], 1
    %321 = vsyncpa %s320, 1
    %322 = vsyncpa [#allocation6], 1
    %323 = vsyncpa [#allocation4], 1
    %s324 = scalar_lea.sflag [#allocation4], 1
    %325 = vsyncpa %s324, 1

</llo_original>
